<compile_context>
chip_gen: v7x
topology: tpu7x:2x2x1
jax: 0.10.0
libtpu: 0.0.40
codegen_flags: <defaults>
</compile_context>

<pallas_src>
import jax
import jax.numpy as jnp
from jax.experimental import pallas as pl
from jax.experimental.pallas import tpu as pltpu


# ---------------------------------------------------------------------------
# Primary path: zero-copy aliased pass-through.
# ---------------------------------------------------------------------------
def _alias_view_kernel(x_ref, o_ref):
    # The output aliases the input buffer, so the data is already in place.
    # touch() pins a fake read+write dependency so the aliased output counts
    # as produced by this kernel; no DMA, no vld/vst, no HBM traffic.
    del x_ref
    pltpu.touch(o_ref)


def _alias_call(x):
    return pl.pallas_call(
        _alias_view_kernel,
        out_shape=jax.ShapeDtypeStruct(x.shape, x.dtype),
        in_specs=[pl.BlockSpec(memory_space=pl.ANY)],   # raw HBM ref, no auto-DMA
        out_specs=pl.BlockSpec(memory_space=pl.ANY),
        input_output_aliases={0: 0},                    # output buffer == input buffer
    )(x)


_ALIAS_OK = None  # cached one-time capability + correctness probe


def _alias_pass_through_supported():
    """Probe once that the aliased no-op kernel compiles AND returns the input."""
    global _ALIAS_OK
    if _ALIAS_OK is None:
        try:
            probe = jnp.arange(8 * 128, dtype=jnp.float32).reshape(8, 128)
            out = jax.block_until_ready(_alias_call(probe))
            _ALIAS_OK = bool(jnp.array_equal(out, probe))
        except Exception:
            _ALIAS_OK = False
    return _ALIAS_OK


# ---------------------------------------------------------------------------
# Fallback path: tiled streaming copy (only used if aliasing is unavailable).
# ---------------------------------------------------------------------------
def _copy_kernel(x_ref, o_ref):
    # Pure lane-dense vld/vst stream; block shapes match exactly, no reshape.
    o_ref[...] = x_ref[...]


def _vmem_budget():
    """(per-buffer target tile bytes, vmem_limit_bytes) sized per TPU generation."""
    try:
        cap = int(getattr(pltpu.get_tpu_info(), "vmem_capacity_bytes", 64 << 20))
    except Exception:
        cap = 64 << 20  # conservative: v7x per-TensorCore VMEM
    # Leave half of physical VMEM to the compiler / surrounding fusions.
    vmem_limit = min(cap // 2, 64 << 20)   # 64 MiB on v5e/v6e, 32 MiB on v7x
    # 2 input + 2 output double-buffers plus headroom must fit under the limit.
    tile_bytes = vmem_limit // 5           # ~12.8 MiB v5e/v6e, ~6.4 MiB v7x
    return tile_bytes, vmem_limit


def _tiled_copy(x2d, *, tile_bytes, vmem_limit):
    TB, CHW = x2d.shape
    itemsize = jnp.dtype(x2d.dtype).itemsize
    # Sublane packing: 8 rows for f32, 16 for bf16, 32 for int8/fp8 -> full
    # unmasked vst instead of masked partial stores.
    sublane = max(8, 32 // itemsize)
    row_bytes = CHW * itemsize
    # Hard per-block cap so 4 block buffers + headroom always fit vmem_limit,
    # while still allowing a single sublane-group stripe to exceed the target.
    hard_cap = max(tile_bytes, (vmem_limit - (4 << 20)) // 4)

    if TB * row_bytes <= hard_cap:
        # Whole array in one block / one grid step.
        row_tile, col_tile = TB, CHW
    elif sublane * row_bytes <= hard_cap or CHW <= 128:
        # Preferred: fully contiguous full-row stripes (one contiguous HBM
        # burst per block), sublane-aligned row count.
        col_tile = CHW
        rows = max(sublane, (tile_bytes // row_bytes) // sublane * sublane)
        row_tile = rows if rows < TB else TB
    else:
        # A single sublane-group of full rows blows the VMEM budget (huge CHW):
        # fall back to lane chunking with 128-aligned column tiles.
        row_tile = TB if TB <= sublane else sublane
        col_tile = min(CHW, max(128, (tile_bytes // (row_tile * itemsize)) // 128 * 128))

    cost = pl.CostEstimate(flops=0, transcendentals=0,
                           bytes_accessed=2 * TB * CHW * itemsize)
    # TODO(synk): on v7x an explicit CORE_PARALLEL row split would engage both
    # TensorCores for this fallback copy; kept plain "parallel" for portability
    # (the primary aliased path moves no data, so this path is rarely taken).
    if col_tile == CHW:
        grid = (pl.cdiv(TB, row_tile),)                     # 1-D grid: no size-1 axis
        spec = pl.BlockSpec((row_tile, CHW), lambda i: (i, 0))
        semantics = ("parallel",)
    else:
        grid = (pl.cdiv(TB, row_tile), pl.cdiv(CHW, col_tile))
        spec = pl.BlockSpec((row_tile, col_tile), lambda i, j: (i, j))
        semantics = ("parallel", "parallel")

    return pl.pallas_call(
        _copy_kernel,
        out_shape=jax.ShapeDtypeStruct((TB, CHW), x2d.dtype),
        grid=grid,
        in_specs=[spec],
        out_specs=spec,
        compiler_params=pltpu.CompilerParams(
            dimension_semantics=semantics,
            vmem_limit_bytes=vmem_limit,
        ),
        cost_estimate=cost,
    )(x2d)


# ---------------------------------------------------------------------------
# Public wrapper: (T*B, ...) -> (T, B, ...)
# ---------------------------------------------------------------------------
_MIN_PALLAS_BYTES = 1 << 20  # below this, launch/step overhead dwarfs the op


def expand_temporal_dim(x_seq: jnp.ndarray, T: int, *, force_pallas: bool = False):
    """Pallas equivalent of ExpandTemporalDim: (T*B, ...) -> (T, B, ...)."""
    TB = x_seq.shape[0]
    if TB % T != 0:
        raise ValueError("leading dim must be divisible by T")
    B = TB // T
    rest = tuple(x_seq.shape[1:])
    out_shape = (T, B) + rest

    itemsize = jnp.dtype(x_seq.dtype).itemsize
    nbytes = x_seq.size * itemsize
    if not force_pallas and nbytes < _MIN_PALLAS_BYTES:
        # Pure metadata view: let XLA bitcast it, no kernel needed.
        return x_seq.reshape(out_shape)

    if _alias_pass_through_supported():
        # Zero-copy: output aliases the input buffer.
        y = _alias_call(x_seq)
        return y.reshape(out_shape)

    # Streaming-copy fallback over a lane-dense 2-D view (free reshape in XLA).
    CHW = 1
    for d in rest:
        CHW *= d
    tile_bytes, vmem_limit = _vmem_budget()
    y2d = _tiled_copy(x_seq.reshape(TB, CHW),
                      tile_bytes=tile_bytes, vmem_limit=vmem_limit)
    return y2d.reshape(out_shape)


if __name__ == "__main__":
    # Small deterministic example: T=4, B=2, C=4, H=16, W=16 -> x_seq is (T*B, C, H, W).
    T, B, C, H, W = 4, 2, 4, 16, 16
    key = jax.random.PRNGKey(0)
    x_seq = jax.random.normal(key, (T * B, C, H, W), dtype=jnp.float32)

    ref = x_seq.reshape(T, B, C, H, W)

    # 1) Run the Pallas path (forced, since the demo tensor is tiny).
    out = jax.block_until_ready(expand_temporal_dim(x_seq, T, force_pallas=True))
    assert out.shape == (T, B, C, H, W)
    assert out.dtype == x_seq.dtype
    assert jnp.array_equal(out, ref), "Pallas path mismatch vs reference reshape"

    # 2) Explicitly validate the streaming-copy fallback kernel as well.
    tile_bytes, vmem_limit = _vmem_budget()
    y2d = _tiled_copy(x_seq.reshape(T * B, C * H * W),
                      tile_bytes=tile_bytes, vmem_limit=vmem_limit)
    y2d = jax.block_until_ready(y2d)
    assert jnp.array_equal(y2d.reshape(T, B, C, H, W), ref), "copy kernel mismatch"

    # 3) Auto path (tiny tensor -> plain reshape fast path).
    out2 = jax.block_until_ready(expand_temporal_dim(x_seq, T))
    assert jnp.array_equal(out2, ref)

    print("KERNEL_OK")
</pallas_src>

<mosaic_0001>
module attributes {stable_mosaic.version = 11 : i64} {
  func.func @_alias_view_kernel(%arg0: memref<8x128xf32, #tpu.memory_space<any>>, %arg1: memref<8x128xf32, #tpu.memory_space<any>>) attributes {dimension_semantics = [], scalar_prefetch = 0 : i64, scratch_operands = 0 : i64, tpu.core_type = #tpu.core_type<tc>} {
    return
  }
}

module attributes {stable_mosaic.version = 11 : i64} {
  func.func @_copy_kernel(%arg0: i32, %arg1: memref<8x1024xf32, #tpu.memory_space<vmem>>, %arg2: memref<8x1024xf32, #tpu.memory_space<vmem>>) attributes {dimension_semantics = [#tpu.dimension_semantics<parallel>], iteration_bounds = array<i64: 1>, scalar_prefetch = 0 : i64, scratch_operands = 0 : i64, tpu.core_type = #tpu.core_type<tc>, window_params = [{transform_indices = @transform_0, window_bounds = array<i64: 8, 1024>}, {transform_indices = @transform_1, window_bounds = array<i64: 8, 1024>}]} {
    %c0 = arith.constant 0 : index
    %c0_0 = arith.constant 0 : index
    %0 = vector.load %arg1[%c0, %c0_0] : memref<8x1024xf32, #tpu.memory_space<vmem>>, vector<8x1024xf32>
    %c0_1 = arith.constant 0 : index
    %c0_2 = arith.constant 0 : index
    %1 = vector.load %arg2[%c0_1, %c0_2] : memref<8x1024xf32, #tpu.memory_space<vmem>>, vector<8x1024xf32>
    tpu.vector_store %arg2[%c0_1, %c0_2], %0 {strides = array<i32>} : memref<8x1024xf32, #tpu.memory_space<vmem>>, vector<8x1024xf32>,
    return
  }
  func.func @transform_0(%arg0: i32) -> (i32, i32) {
    %c0_i32 = arith.constant 0 : i32
    %c0_i32_0 = arith.constant 0 : i32
    return %arg0, %c0_i32 : i32, i32
  }
  func.func @transform_1(%arg0: i32) -> (i32, i32) {
    %c0_i32 = arith.constant 0 : i32
    %c0_i32_0 = arith.constant 0 : i32
    return %arg0, %c0_i32 : i32, i32
  }
}

</mosaic_0001>

<llo_original>
// kernel: tpu_custom_call.1
$region0: #{tpu_custom_call.1}
  #allocation0 [shape = 'u32[]', space=smem, size = 0x4, offset = 0x4, fixed_abs, tag = 'smem constant byte address 0x4 - core index']
  #allocation1 [shape = 'u32[144,128]{1,0:T(1,128)}', space=vmem, size = 0x12000, scoped, tag = 'internal scratch']
  %s0 = inlined_call_operand.hbm [shape: f32[8,128], index: 0, kind: input, shape index: {}, may-alias: {0,1}]
  %s1 = inlined_call_operand.hbm [shape: f32[8,128], index: 1, kind: output, shape index: {}, may-alias: {0,1}]
  %s2 = sld [smem:[#allocation0]]
  $region2: #{tpu_custom_call.1} parent=0
    _
  %s4 = ssub.s32 1, %s2
  %s5 = scalar_select 0, %s4, %s2

// kernel: tpu_custom_call.1
$region0: #{tpu_custom_call.1}
  #allocation0 [shape = 'u32[]', space=smem, size = 0x4, offset = 0x4, fixed_abs, tag = 'smem constant byte address 0x4 - core index']
  #allocation1 [shape = 'u32[144,128]{1,0:T(1,128)}', space=vmem, size = 0x12000, scoped, tag = 'internal scratch']
  %s0 = inlined_call_operand.hbm [shape: f32[8,1024], index: 0, kind: input, shape index: {}]
  %s1 = inlined_call_operand.hbm [shape: f32[8,1024], index: 1, kind: output, shape index: {}]
  %s2 = sld [smem:[#allocation0]]
  $region18: #{tpu_custom_call.1} parent=0
    _
  %s4 = ssub.s32 1, %s2
  %s5 = scalar_select 0, %s4, %s2
  $region1: #{tpu_custom_call.1} parent=0
    #allocation2 [shape = 'u8[32768]{0}', space=vmem, size = 0x8000, scoped, tag = 'input window, operand 0, single buffered']
    #allocation3 [shape = 's32[1]{0}', space=sflag, size = 0x4, scoped, tag = 'scoped memory for tpu_custom_call.1']
    #allocation4 [shape = 's32[1]{0}', space=sflag, size = 0x4, scoped, tag = 'scoped memory for tpu_custom_call.1']
    #allocation5 [shape = 'u8[32768]{0}', space=vmem, size = 0x8000, scoped, tag = 'output window, operand 0, single buffered']
    %6 = vsyncpa [#allocation3], 0
    %7 = vsyncpa [#allocation4], 0
    // Predicated region
    $region2: #{tpu_custom_call.1} parent=1 // pred_check
      _
    $region3: #{tpu_custom_call.1} parent=1 // pred_check_branch
      %9 = sbr.rel (0) target = $region5
    $region4: #{tpu_custom_call.1} parent=1 // pred_region
      %s11 = ssub.s32 1024, 1024
      %12 = vsyncadd [#allocation3], %s11
      %s14 = sshll.u32 [#allocation2], 4
      %s15 = int_to_ptr.vmem [resolvable:$true] %s14
      %17 = dma.hbm_to_vmem [thread:$0]  %s0, 1024, %s15, [#allocation3]
    $region5: #{tpu_custom_call.1} parent=1 // pred_fallthru
      _
    // Predicated region
    $region6: #{tpu_custom_call.1} parent=1 // pred_check
      _
    $region7: #{tpu_custom_call.1} parent=1 // pred_check_branch
      %19 = sbr.rel (0) target = $region9
    $region8: #{tpu_custom_call.1} parent=1 // pred_region
      %20 = dma.done [#allocation3], 1024
    $region9: #{tpu_custom_call.1} parent=1 // pred_fallthru
      _
    %v21 = vld [vmem:[#allocation2] sm:$0xff]
    %v22 = vld [vmem:[#allocation2 + $0x8] sm:$0xff]
    %v23 = vld [vmem:[#allocation2 + $0x10] sm:$0xff]
    %v24 = vld [vmem:[#allocation2 + $0x18] sm:$0xff]
    %v25 = vld [vmem:[#allocation2 + $0x20] sm:$0xff]
    %v26 = vld [vmem:[#allocation2 + $0x28] sm:$0xff]
    %v27 = vld [vmem:[#allocation2 + $0x30] sm:$0xff]
    %v28 = vld [vmem:[#allocation2 + $0x38] sm:$0xff]
    %29 = vst [vmem:[#allocation5] sm:$0xff] %v21
    %30 = vst [vmem:[#allocation5 + $0x8] sm:$0xff] %v22
    %31 = vst [vmem:[#allocation5 + $0x10] sm:$0xff] %v23
    %32 = vst [vmem:[#allocation5 + $0x18] sm:$0xff] %v24
    %33 = vst [vmem:[#allocation5 + $0x20] sm:$0xff] %v25
    %34 = vst [vmem:[#allocation5 + $0x28] sm:$0xff] %v26
    %35 = vst [vmem:[#allocation5 + $0x30] sm:$0xff] %v27
    %36 = vst [vmem:[#allocation5 + $0x38] sm:$0xff] %v28
    // Predicated region
    $region10: #{tpu_custom_call.1} parent=1 // pred_check
      _
    $region11: #{tpu_custom_call.1} parent=1 // pred_check_branch
      %38 = sbr.rel (0) target = $region13
    $region12: #{tpu_custom_call.1} parent=1 // pred_region
      %s40 = ssub.s32 1024, 1024
      %41 = vsyncadd [#allocation4], %s40
      %s43 = sshll.u32 [#allocation5], 4
      %s44 = int_to_ptr.vmem [resolvable:$true] %s43
      %46 = dma.vmem_to_hbm [thread:$0]  %s44, 1024, %s1, [#allocation4]
    $region13: #{tpu_custom_call.1} parent=1 // pred_fallthru
      _
    // Predicated region
    $region14: #{tpu_custom_call.1} parent=1 // pred_check
      _
    $region15: #{tpu_custom_call.1} parent=1 // pred_check_branch
      %48 = sbr.rel (0) target = $region17
    $region16: #{tpu_custom_call.1} parent=1 // pred_region
      %49 = dma.done [#allocation4], 1024
    $region17: #{tpu_custom_call.1} parent=1 // pred_fallthru
      _
    %50 = vsyncpa [#allocation3], 1
    %51 = vsyncpa [#allocation4], 1

</llo_original>
